<compile_context>
chip_gen: v7x
topology: tpu7x:2x2x1
jax: 0.10.0
libtpu: 0.0.40
codegen_flags: <defaults>
</compile_context>

<pallas_src>
import functools

import jax
import jax.numpy as jnp
from jax.experimental import pallas as pl
from jax.experimental.pallas import tpu as pltpu

LANE = 128
SUBLANE = 8
VMEM_LIMIT_BYTES = 32 << 20   # requested scoped VMEM (safe on v5e/v6e/v7x)
VMEM_BUDGET = 24 << 20        # conservative sizing target for one grid step


def _round_up(x, m):
    return (x + m - 1) // m * m


def _step_vmem_bytes(bblk, Sp, Hp, in_item, mm_item):
    """Approximate VMEM needed for one grid step (double-buffered blocks + live values)."""
    blocks = 2 * bblk * Hp * Hp * in_item        # hidden block (double-buffered)
    blocks += 2 * bblk * Sp * Hp * in_item       # encoder block
    blocks += 2 * bblk * Sp * Hp * 4             # f32 output block
    blocks += 2 * Hp * Hp * in_item              # shared W^T block
    live = bblk * (Hp * Hp + Sp * Hp) * mm_item + Hp * Hp * mm_item   # in-kernel casts
    live += 3 * bblk * Sp * Hp * 4               # t / s / e f32 intermediates
    return blocks + live


def _choose_bblk(B, Sp, Hp, in_item, mm_item):
    # Largest divisor of B whose block set fits the VMEM budget; keep at least
    # two grid steps when B >= 2 so both of v7x's TensorCores get work
    # (a second ~0.35 us grid step is noise on single-TC v5e/v6e).
    cap = B if B < 2 else (B + 1) // 2
    best = 1
    for d in range(1, cap + 1):
        if B % d == 0 and _step_vmem_bytes(d, Sp, Hp, in_item, mm_item) <= VMEM_BUDGET:
            best = d
    return best


def attention_kernel(hidden_ref, enc_ref, wT_ref, out_ref, *,
                     valid_h, matmul_dtype, seq_major):
    # hidden_ref: (Bb, Hp, Hp), enc_ref: (Bb, Sp, Hp), wT_ref: (Hp, Hp),
    # out_ref:   (Bb, Sp, Hp)   (lane-dense: Hp is a multiple of 128).
    # Cast MXU operands in-kernel (free VPU op; no wrapper HBM round-trip).
    h = hidden_ref[...].astype(matmul_dtype)
    enc = enc_ref[...].astype(matmul_dtype)
    wT = wT_ref[...].astype(matmul_dtype)   # W pre-transposed in the wrapper

    Bb, Sp, Hp = enc.shape

    if seq_major:
        # S < H: reassociated  s = (enc @ hidden) @ W^T  (2*S*H^2 flops, (S,H) live).
        t = jnp.einsum("bsi,bij->bsj", enc, h, preferred_element_type=jnp.float32)
        t = t.astype(matmul_dtype)
        # Fold (B, S) into one M axis: a single large MXU matmul vs the shared weight.
        s = jnp.dot(t.reshape(Bb * Sp, Hp), wT, preferred_element_type=jnp.float32)
        s = s.reshape(Bb, Sp, Hp)
    else:
        # S >= H: original PyTorch order  x = hidden @ W^T, then enc @ x
        # (fewer flops for long sequences; first matmul has M = Bb*Hp).
        x = jnp.dot(h.reshape(Bb * Hp, Hp), wT, preferred_element_type=jnp.float32)
        x = x.reshape(Bb, Hp, Hp).astype(matmul_dtype)
        s = jnp.einsum("bsi,bio->bso", enc, x, preferred_element_type=jnp.float32)

    # Numerically-stable softmax over the (padded) hidden axis, in f32.
    if valid_h < s.shape[-1]:
        lane = jax.lax.broadcasted_iota(jnp.int32, s.shape, dimension=2)
        s = jnp.where(lane < valid_h, s, -jnp.inf)   # exclude padded lanes
    m = jnp.max(s, axis=-1, keepdims=True)
    e = jnp.exp(s - m)
    denom = jnp.sum(e, axis=-1, keepdims=True)
    inv = pl.reciprocal(denom, approx=True)          # EUP vrcp, effectively free
    out_ref[...] = (e * inv).astype(out_ref.dtype)


def attention_forward(hidden, encoder_outputs, w_attn, mask=None, *,
                      matmul_dtype=jnp.bfloat16):
    # `mask` accepted for signature parity but (like the PyTorch module) unused.
    B, S, H = encoder_outputs.shape
    assert hidden.shape == (B, H, H)
    assert w_attn.shape == (H, H)

    Hp = _round_up(H, LANE)
    Sp = _round_up(S, SUBLANE)

    # Pad only when genuinely ragged (pads / final slice are extra HBM
    # read+writes outside the kernel).  No dtype cast here: MXU operand cast
    # happens inside the kernel, so bf16 inputs also pass straight through.
    hidden_p = hidden if Hp == H else jnp.pad(hidden, ((0, 0), (0, Hp - H), (0, Hp - H)))
    enc_p = encoder_outputs
    if Sp != S or Hp != H:
        enc_p = jnp.pad(encoder_outputs, ((0, 0), (0, Sp - S), (0, Hp - H)))
    # Pre-transpose the (constant) weight once in the wrapper -> no in-kernel XLU transpose.
    wT = w_attn.T
    wT_p = wT if Hp == H else jnp.pad(wT, ((0, Hp - H), (0, Hp - H)))

    in_item = jnp.dtype(hidden_p.dtype).itemsize
    mm_item = jnp.dtype(matmul_dtype).itemsize

    bblk = _choose_bblk(B, Sp, Hp, in_item, mm_item)
    grid = (B // bblk,)
    seq_major = S < H   # pick the cheaper matmul association at trace time

    out_p = pl.pallas_call(
        functools.partial(attention_kernel, valid_h=H,
                          matmul_dtype=matmul_dtype, seq_major=seq_major),
        out_shape=jax.ShapeDtypeStruct((B, Sp, Hp), jnp.float32),
        grid_spec=pltpu.PrefetchScalarGridSpec(
            num_scalar_prefetch=0,
            grid=grid,
            in_specs=[
                pl.BlockSpec((bblk, Hp, Hp), lambda b: (b, 0, 0)),   # hidden
                pl.BlockSpec((bblk, Sp, Hp), lambda b: (b, 0, 0)),   # encoder_outputs
                pl.BlockSpec((Hp, Hp), lambda b: (0, 0)),            # W^T (shared, fetched once)
            ],
            out_specs=pl.BlockSpec((bblk, Sp, Hp), lambda b: (b, 0, 0)),
        ),
        compiler_params=pltpu.CompilerParams(
            dimension_semantics=("parallel",),     # batch axis shards across v7x's 2 TCs
            vmem_limit_bytes=VMEM_LIMIT_BYTES,
        ),
    )(hidden_p, enc_p, wT_p)

    if Sp == S and Hp == H:
        return out_p
    return out_p[:, :S, :H]


def attention_reference(hidden, encoder_outputs, w_attn):
    # Pure-JAX reference mirroring the PyTorch forward (original association, f32).
    x = jnp.einsum("bij,oj->bio", hidden, w_attn)       # Linear(hidden), no bias
    s = jnp.einsum("bsh,bho->bso", encoder_outputs, x)  # bmm
    return jax.nn.softmax(s, axis=-1)


if __name__ == "__main__":
    B, S, H = 2, 8, 32  # batch=2, seq=8, hidden=32

    key = jax.random.PRNGKey(0)
    k_h, k_e, k_w = jax.random.split(key, 3)

    hidden = jax.random.normal(k_h, (B, H, H), dtype=jnp.float32)
    encoder_outputs = jax.random.normal(k_e, (B, S, H), dtype=jnp.float32)
    mask = jnp.ones((B, S), dtype=jnp.float32)  # unused by forward (as in PyTorch)
    w_attn = jax.random.normal(k_w, (H, H), dtype=jnp.float32) * 0.1
    # self.fc = nn.Linear(2H, H) is defined in the module but never used in forward.

    ref = attention_reference(hidden, encoder_outputs, w_attn)

    # Default path: bf16 MXU operands (cast in-kernel), f32 accumulate/softmax,
    # S < H -> reassociated matmuls.  Tolerance covers bf16 operands + approx vrcp.
    out = jax.block_until_ready(attention_forward(hidden, encoder_outputs, w_attn, mask))
    assert out.shape == (B, S, H)
    assert jnp.allclose(out, ref, atol=4e-2, rtol=4e-2), float(jnp.max(jnp.abs(out - ref)))
    assert jnp.allclose(jnp.sum(out, axis=-1), 1.0, atol=5e-3)

    # Exact-ish f32 operand path (tighter tolerance; only approx vrcp remains).
    out_f32 = jax.block_until_ready(
        attention_forward(hidden, encoder_outputs, w_attn, mask, matmul_dtype=jnp.float32))
    assert jnp.allclose(out_f32, ref, atol=5e-3, rtol=5e-3), float(jnp.max(jnp.abs(out_f32 - ref)))

    # S >= H exercises the original-order matmul association branch.
    S2 = 40
    enc2 = jax.random.normal(jax.random.PRNGKey(1), (B, S2, H), dtype=jnp.float32)
    ref2 = attention_reference(hidden, enc2, w_attn)
    out2 = jax.block_until_ready(attention_forward(hidden, enc2, w_attn))
    assert out2.shape == (B, S2, H)
    assert jnp.allclose(out2, ref2, atol=4e-2, rtol=4e-2), float(jnp.max(jnp.abs(out2 - ref2)))

    print("KERNEL_OK")
</pallas_src>

<mosaic_0001>
module attributes {stable_mosaic.version = 11 : i64} {
  func.func @attention_kernel(%arg0: i32, %arg1: memref<1x128x128xf32, #tpu.memory_space<vmem>>, %arg2: memref<1x8x128xf32, #tpu.memory_space<vmem>>, %arg3: memref<128x128xf32, #tpu.memory_space<vmem>>, %arg4: memref<1x8x128xf32, #tpu.memory_space<vmem>>) attributes {dimension_semantics = [#tpu.dimension_semantics<parallel>], iteration_bounds = array<i64: 2>, scalar_prefetch = 0 : i64, scratch_operands = 0 : i64, tpu.core_type = #tpu.core_type<tc>, window_params = [{transform_indices = @transform_0, window_bounds = array<i64: 1, 128, 128>}, {transform_indices = @transform_1, window_bounds = array<i64: 1, 8, 128>}, {pipeline_mode = #tpu.pipeline_mode<synchronous>, transform_indices = @transform_2, window_bounds = array<i64: 128, 128>}, {transform_indices = @transform_3, window_bounds = array<i64: 1, 8, 128>}]} {
    %c0 = arith.constant 0 : index
    %c0_0 = arith.constant 0 : index
    %c0_1 = arith.constant 0 : index
    %0 = vector.load %arg1[%c0, %c0_0, %c0_1] : memref<1x128x128xf32, #tpu.memory_space<vmem>>, vector<1x128x128xf32>
    %1 = arith.truncf %0 : vector<1x128x128xf32> to vector<1x128x128xbf16>
    %c0_2 = arith.constant 0 : index
    %c0_3 = arith.constant 0 : index
    %c0_4 = arith.constant 0 : index
    %2 = vector.load %arg2[%c0_2, %c0_3, %c0_4] : memref<1x8x128xf32, #tpu.memory_space<vmem>>, vector<1x8x128xf32>
    %3 = arith.truncf %2 : vector<1x8x128xf32> to vector<1x8x128xbf16>
    %c0_5 = arith.constant 0 : index
    %c0_6 = arith.constant 0 : index
    %4 = vector.load %arg3[%c0_5, %c0_6] : memref<128x128xf32, #tpu.memory_space<vmem>>, vector<128x128xf32>
    %5 = arith.truncf %4 : vector<128x128xf32> to vector<128x128xbf16>
    "tpu.trace_start"() <{level = 10 : i32, message = "bsi,bij->bsj"}> : () -> ()
    %cst = arith.constant dense<0.000000e+00> : vector<1x8x128xf32>
    %6 = tpu.matmul %3, %1, %cst {dimension_numbers = #tpu.dot_dimension_numbers<[2], [1], [1], [2], [0, 0, 0, 1, 1, 2], [0], [0]>} : vector<1x8x128xbf16>, vector<1x128x128xbf16>, vector<1x8x128xf32> -> vector<1x8x128xf32>
    "tpu.trace_stop"() : () -> ()
    %7 = arith.truncf %6 : vector<1x8x128xf32> to vector<1x8x128xbf16>
    %8 = vector.shape_cast %7 : vector<1x8x128xbf16> to vector<8x128xbf16>
    %cst_7 = arith.constant dense<0.000000e+00> : vector<8x128xf32>
    %9 = tpu.matmul %8, %5, %cst_7 {dimension_numbers = #tpu.dot_dimension_numbers<[1], [0], [0], [1], [0, 0, 1, 1], [], []>} : vector<8x128xbf16>, vector<128x128xbf16>, vector<8x128xf32> -> vector<8x128xf32>
    %10 = vector.shape_cast %9 : vector<8x128xf32> to vector<1x8x128xf32>
    %11 = tpu.iota {dimensions = array<i32: 2>} : vector<1x8x128xi32>
    %c32_i32 = arith.constant 32 : i32
    %12 = vector.broadcast %c32_i32 : i32 to vector<1x8x128xi32>
    %13 = arith.cmpi slt, %11, %12 : vector<1x8x128xi32>
    %cst_8 = arith.constant 0xFF800000 : f32
    %14 = vector.broadcast %cst_8 : f32 to vector<1x8x128xf32>
    %15 = arith.select %13, %10, %14 : vector<1x8x128xi1>, vector<1x8x128xf32>
    %cst_9 = arith.constant dense<0xFF800000> : vector<1x8xf32>
    %16 = vector.multi_reduction <maximumf>, %15, %cst_9 [2] : vector<1x8x128xf32> to vector<1x8xf32>
    %17 = vector.shape_cast %16 : vector<1x8xf32> to vector<1x8x1xf32>
    %18 = vector.broadcast %17 : vector<1x8x1xf32> to vector<1x8x128xf32>
    %19 = arith.subf %15, %18 : vector<1x8x128xf32>
    %20 = math.exp %19 : vector<1x8x128xf32>
    %cst_10 = arith.constant dense<0.000000e+00> : vector<1x8xf32>
    %21 = vector.multi_reduction <add>, %20, %cst_10 [2] : vector<1x8x128xf32> to vector<1x8xf32>
    %22 = vector.shape_cast %21 : vector<1x8xf32> to vector<1x8x1xf32>
    %23 = tpu.reciprocal %22 {approx = true} : vector<1x8x1xf32> -> vector<1x8x1xf32>
    %24 = vector.broadcast %23 : vector<1x8x1xf32> to vector<1x8x128xf32>
    %25 = arith.mulf %20, %24 : vector<1x8x128xf32>
    %c0_11 = arith.constant 0 : index
    %c0_12 = arith.constant 0 : index
    %c0_13 = arith.constant 0 : index
    %26 = vector.load %arg4[%c0_11, %c0_12, %c0_13] : memref<1x8x128xf32, #tpu.memory_space<vmem>>, vector<1x8x128xf32>
    tpu.vector_store %arg4[%c0_11, %c0_12, %c0_13], %25 {strides = array<i32>} : memref<1x8x128xf32, #tpu.memory_space<vmem>>, vector<1x8x128xf32>,
    return
  }
  func.func @transform_0(%arg0: i32) -> (i32, i32, i32) {
    %c0_i32 = arith.constant 0 : i32
    %c0_i32_0 = arith.constant 0 : i32
    %c0_i32_1 = arith.constant 0 : i32
    return %arg0, %c0_i32, %c0_i32_0 : i32, i32, i32
  }
  func.func @transform_1(%arg0: i32) -> (i32, i32, i32) {
    %c0_i32 = arith.constant 0 : i32
    %c0_i32_0 = arith.constant 0 : i32
    %c0_i32_1 = arith.constant 0 : i32
    return %arg0, %c0_i32, %c0_i32_0 : i32, i32, i32
  }
  func.func @transform_2(%arg0: i32) -> (i32, i32) {
    %c0_i32 = arith.constant 0 : i32
    %c0_i32_0 = arith.constant 0 : i32
    %c0_i32_1 = arith.constant 0 : i32
    return %c0_i32, %c0_i32_0 : i32, i32
  }
  func.func @transform_3(%arg0: i32) -> (i32, i32, i32) {
    %c0_i32 = arith.constant 0 : i32
    %c0_i32_0 = arith.constant 0 : i32
    %c0_i32_1 = arith.constant 0 : i32
    return %arg0, %c0_i32, %c0_i32_0 : i32, i32, i32
  }
}

</mosaic_0001>

<llo_original>
// kernel: tpu_custom_call.1
$region0: #{tpu_custom_call.1}
  #allocation0 [shape = 'u32[]', space=smem, size = 0x4, offset = 0x4, fixed_abs, tag = 'smem constant byte address 0x4 - core index']
  #allocation1 [shape = 'u32[144,128]{1,0:T(1,128)}', space=vmem, size = 0x12000, scoped, tag = 'internal scratch']
  %s0 = inlined_call_operand.hbm [shape: f32[2,128,128], index: 0, kind: input, shape index: {}]
  %s1 = inlined_call_operand.hbm [shape: f32[2,8,128], index: 1, kind: input, shape index: {}]
  %s2 = inlined_call_operand.hbm [shape: f32[128,128], index: 2, kind: input, shape index: {}]
  %s3 = inlined_call_operand.hbm [shape: f32[2,8,128], index: 3, kind: output, shape index: {}]
  %s4 = sld [smem:[#allocation0]]
  $region57: #{tpu_custom_call.1} parent=0
    _
  %s6 = ssub.s32 1, %s4
  %s7 = scalar_select 0, %s6, %s4
  $region1: #{tpu_custom_call.1} parent=0
    #allocation2 [shape = 'u8[131072]{0}', space=vmem, size = 0x20000, scoped, tag = 'input window, operand 0']
    #allocation3 [shape = 's32[2]{0}', space=sflag, size = 0x8, scoped, tag = 'scoped memory for tpu_custom_call.1']
    #allocation4 [shape = 's32[2]{0}', space=sflag, size = 0x8, scoped, tag = 'scoped memory for tpu_custom_call.1']
    #allocation5 [shape = 'u8[8192]{0}', space=vmem, size = 0x2000, scoped, tag = 'input window, operand 1']
    #allocation6 [shape = 's32[2]{0}', space=sflag, size = 0x8, scoped, tag = 'scoped memory for tpu_custom_call.1']
    #allocation7 [shape = 'u8[65536]{0}', space=vmem, size = 0x10000, scoped, tag = 'input window, operand 2, single buffered']
    #allocation8 [shape = 'u8[8192]{0}', space=vmem, size = 0x2000, scoped, tag = 'output window, operand 0']
    %8 = vsyncpa [#allocation3], 0
    %s9 = scalar_lea.sflag [#allocation3], 1
    %10 = vsyncpa %s9, 0
    %11 = vsyncpa [#allocation6], 0
    %s12 = scalar_lea.sflag [#allocation6], 1
    %13 = vsyncpa %s12, 0
    %14 = vsyncpa [#allocation4], 0
    %s15 = scalar_lea.sflag [#allocation4], 1
    %16 = vsyncpa %s15, 0
    loop: start=0, step=1, limit=4
    $region2: #{tpu_custom_call.1} parent=1 // loop_pre_header
      _
    $region3: #{tpu_custom_call.1} parent=1 // loop_header
      %s18 = sphi 0, %s22
      %p19 = scmp.ge.s32.totalorder %s18, 4
      %s28 = sphi 0, %s30
      %s31 = sphi 0, %s28
      %s32 = sphi 0, %s31
      %s48 = sphi 0, %s32
      %s54 = sphi 0, %s56
      %s57 = sphi 0, %s54
      %s58 = sphi 0, %s57
      %s74 = sphi 0, %s58
      %s78 = sphi 0, %s78
      %s80 = sphi 0, %s78
      %s81 = sphi 0, %s80
      %s95 = sphi 0, %s81
      %s101 = sphi 0, %s103
      %s104 = sphi 0, %s101
      %s105 = sphi 0, %s104
      %s121 = sphi 0, %s105
    $region4: #{tpu_custom_call.1} parent=1 // loop_header_branch
      %21 = sbr.rel (%p19) target = $region8
    $region5: #{tpu_custom_call.1} parent=1 // loop_body
      %s23 = ssub.s32 %s18, 1
      %s24 = ssub.s32 %s18, 2
      %s25 = sadd.s32 %s18, 1
      %s26 = ssub.s32 %s18, %s25
      %p27 = scmp.eq.s32.totalorder %s26, 0
      %s29 = sadd.s32 %s28, 1
      %s30 = scalar_select %p27, %s28, %s29
      %p33 = pneg %p27
      %p34 = scmp.eq.s32.totalorder %s18, 1
      %p35 = por %p33, %p34
      %p36 = scmp.ne.s32.totalorder %s28, %s31
      %p37 = scmp.eq.s32.totalorder %s18, 0
      %p38 = por %p36, %p37
      %p39 = scmp.ne.s32.totalorder %s28, %s31
      %p40 = scmp.eq.s32.totalorder %s23, 1
      %p41 = por %p39, %p40
      %p42 = scmp.ne.s32.totalorder %s31, %s32
      %p43 = scmp.eq.s32.totalorder %s23, 0
      %p44 = por %p42, %p43
      %p45 = scmp.ne.s32.totalorder %s31, %s32
      %p46 = scmp.eq.s32.totalorder %s24, 1
      %p47 = por %p45, %p46
      %p49 = scmp.ne.s32.totalorder %s32, %s48
      %p50 = scmp.eq.s32.totalorder %s24, 0
      %p51 = por %p49, %p50
      %s52 = ssub.s32 %s18, %s25
      %p53 = scmp.eq.s32.totalorder %s52, 0
      %s55 = sadd.s32 %s54, 1
      %s56 = scalar_select %p53, %s54, %s55
      %p59 = pneg %p53
      %p60 = scmp.eq.s32.totalorder %s18, 1
      %p61 = por %p59, %p60
      %p62 = scmp.ne.s32.totalorder %s54, %s57
      %p63 = scmp.eq.s32.totalorder %s18, 0
      %p64 = por %p62, %p63
      %p65 = scmp.ne.s32.totalorder %s54, %s57
      %p66 = scmp.eq.s32.totalorder %s23, 1
      %p67 = por %p65, %p66
      %p68 = scmp.ne.s32.totalorder %s57, %s58
      %p69 = scmp.eq.s32.totalorder %s23, 0
      %p70 = por %p68, %p69
      %p71 = scmp.ne.s32.totalorder %s57, %s58
      %p72 = scmp.eq.s32.totalorder %s24, 1
      %p73 = por %p71, %p72
      %p75 = scmp.ne.s32.totalorder %s58, %s74
      %p76 = scmp.eq.s32.totalorder %s24, 0
      %p77 = por %p75, %p76
      %s79 = sadd.s32 %s78, 1
      %p82 = scmp.eq.s32.totalorder %s18, 1
      %p83 = scmp.ne.s32.totalorder %s78, %s80
      %p84 = scmp.eq.s32.totalorder %s18, 0
      %p85 = por %p83, %p84
      %p86 = scmp.ne.s32.totalorder %s78, %s80
      %p87 = scmp.eq.s32.totalorder %s23, 1
      %p88 = por %p86, %p87
      %p89 = scmp.ne.s32.totalorder %s80, %s81
      %p90 = scmp.eq.s32.totalorder %s23, 0
      %p91 = por %p89, %p90
      %p92 = scmp.ne.s32.totalorder %s80, %s81
      %p93 = scmp.eq.s32.totalorder %s24, 1
      %p94 = por %p92, %p93
      %p96 = scmp.ne.s32.totalorder %s81, %s95
      %p97 = scmp.eq.s32.totalorder %s24, 0
      %p98 = por %p96, %p97
      %s99 = ssub.s32 %s18, %s25
      %p100 = scmp.eq.s32.totalorder %s99, 0
      %s102 = sadd.s32 %s101, 1
      %s103 = scalar_select %p100, %s101, %s102
      %p106 = pneg %p100
      %p107 = scmp.eq.s32.totalorder %s18, 1
      %p108 = por %p106, %p107
      %p109 = scmp.ne.s32.totalorder %s101, %s104
      %p110 = scmp.eq.s32.totalorder %s18, 0
      %p111 = por %p109, %p110
      %p112 = scmp.ne.s32.totalorder %s101, %s104
      %p113 = scmp.eq.s32.totalorder %s23, 1
      %p114 = por %p112, %p113
      %p115 = scmp.ne.s32.totalorder %s104, %s105
      %p116 = scmp.eq.s32.totalorder %s23, 0
      %p117 = por %p115, %p116
      %p118 = scmp.ne.s32.totalorder %s104, %s105
      %p119 = scmp.eq.s32.totalorder %s24, 1
      %p120 = por %p118, %p119
      %p122 = scmp.ne.s32.totalorder %s105, %s121
      %p123 = scmp.eq.s32.totalorder %s24, 0
      %p124 = por %p122, %p123
      %p125 = scmp.le.s32.totalorder 1, %s18
      %p126 = scmp.lt.s32.totalorder %s18, 3
      %p127 = pnand %p125, %p126
      %p128 = pneg %p127
      // Predicated region
      $region9: #{tpu_custom_call.1} parent=5 // pred_check
        _
      $region10: #{tpu_custom_call.1} parent=5 // pred_check_branch
        %130 = sbr.rel (%p127) target = $region12
      $region11: #{tpu_custom_call.1} parent=5 // pred_region
        %s131 = ssub.s32 %s18, 1
        // Predicated region
        $region13: #{tpu_custom_call.1} parent=11 // pred_check
          %p132 = pneg %p91
        $region14: #{tpu_custom_call.1} parent=11 // pred_check_branch
          %134 = sbr.rel (%p132) target = $region16
        $region15: #{tpu_custom_call.1} parent=11 // pred_region
          %s136 = ssub.s32 2048, 2048
          %137 = vsyncadd [#allocation6], %s136
          %s138 = sshll.u32 [#allocation7], 4
          %s139 = int_to_ptr.vmem [resolvable:$true] %s138
          %144 = dma.hbm_to_vmem [thread:$0]  %s2, 2048, %s139, [#allocation6], 128, 128, 8
        $region16: #{tpu_custom_call.1} parent=11 // pred_fallthru
          _
      $region12: #{tpu_custom_call.1} parent=5 // pred_fallthru
        _
      %p145 = scmp.lt.s32.totalorder %s18, 2
      // Predicated region
      $region17: #{tpu_custom_call.1} parent=5 // pred_check
        %p146 = pneg %p145
      $region18: #{tpu_custom_call.1} parent=5 // pred_check_branch
        %148 = sbr.rel (%p146) target = $region20
      $region19: #{tpu_custom_call.1} parent=5 // pred_region
        // Predicated region
        $region21: #{tpu_custom_call.1} parent=19 // pred_check
          %p149 = pneg %p38
        $region22: #{tpu_custom_call.1} parent=19 // pred_check_branch
          %151 = sbr.rel (%p149) target = $region24
        $region23: #{tpu_custom_call.1} parent=19 // pred_region
          %s152 = sand.u32 %s28, 1
          %s153 = scalar_lea.sflag [#allocation3], %s152
          %s154 = sand.u32 %s28, 1
          %s155 = smul.addr %s154, 128
          %s156 = scalar_lea.vmem [#allocation2], %s155
          %s158 = ssub.s32 2048, 2048
          %159 = vsyncadd %s153, %s158
          %s160 = smul.addr %s18, 16
          %s161 = smul.addr %s160, 128
          %s162 = scalar_lea.hbm %s0, %s161
          %s163 = sshll.u32 %s156, 4
          %s164 = int_to_ptr.vmem [resolvable:$true] %s163
          %169 = dma.hbm_to_vmem [thread:$0]  %s162, 2048, %s164, %s153, 128, 128, 8
        $region24: #{tpu_custom_call.1} parent=19 // pred_fallthru
          _
        // Predicated region
        $region25: #{tpu_custom_call.1} parent=19 // pred_check
          %p170 = pneg %p64
        $region26: #{tpu_custom_call.1} parent=19 // pred_check_branch
          %172 = sbr.rel (%p170) target = $region28
        $region27: #{tpu_custom_call.1} parent=19 // pred_region
          %s173 = sand.u32 %s18, 1
          %s174 = scalar_lea.sflag [#allocation6], %s173
          %s175 = sand.u32 %s54, 1
          %s176 = smul.addr %s175, 8
          %s177 = scalar_lea.vmem [#allocation5], %s176
          %s179 = ssub.s32 128, 128
          %180 = vsyncadd %s174, %s179
          %s181 = smul.addr %s18, 128
          %s182 = scalar_lea.hbm %s1, %s181
          %s184 = sshll.u32 %s177, 4
          %s185 = int_to_ptr.vmem [resolvable:$true] %s184
          %187 = dma.hbm_to_vmem [thread:$0]  %s182, 128, %s185, %s174
        $region28: #{tpu_custom_call.1} parent=19 // pred_fallthru
          _
      $region20: #{tpu_custom_call.1} parent=5 // pred_fallthru
        _
      %p188 = scmp.le.s32.totalorder 1, %s18
      %p189 = scmp.lt.s32.totalorder %s18, 3
      %p190 = pnand %p188, %p189
      %p191 = pneg %p190
      // Predicated region
      $region29: #{tpu_custom_call.1} parent=5 // pred_check
        _
      $region30: #{tpu_custom_call.1} parent=5 // pred_check_branch
        %193 = sbr.rel (%p190) target = $region32
      $region31: #{tpu_custom_call.1} parent=5 // pred_region
        %s194 = ssub.s32 %s18, 1
        %s195 = sand.u32 %s31, 1
        %s196 = scalar_lea.sflag [#allocation3], %s195
        %s197 = sand.u32 %s31, 1
        %s198 = smul.addr %s197, 128
        %s199 = scalar_lea.vmem [#allocation2], %s198
        // Predicated region
        $region33: #{tpu_custom_call.1} parent=31 // pred_check
          %p200 = pneg %p44
        $region34: #{tpu_custom_call.1} parent=31 // pred_check_branch
          %202 = sbr.rel (%p200) target = $region36
        $region35: #{tpu_custom_call.1} parent=31 // pred_region
          %203 = dma.done %s196, 2048
        $region36: #{tpu_custom_call.1} parent=31 // pred_fallthru
          _
        %s204 = sand.u32 %s23, 1
        %s205 = scalar_lea.sflag [#allocation6], %s204
        %s206 = sand.u32 %s57, 1
        %s207 = smul.addr %s206, 8
        %s208 = scalar_lea.vmem [#allocation5], %s207
        // Predicated region
        $region37: #{tpu_custom_call.1} parent=31 // pred_check
          %p209 = pneg %p70
        $region38: #{tpu_custom_call.1} parent=31 // pred_check_branch
          %211 = sbr.rel (%p209) target = $region40
        $region39: #{tpu_custom_call.1} parent=31 // pred_region
          %212 = dma.done %s205, 128
        $region40: #{tpu_custom_call.1} parent=31 // pred_fallthru
          _
        // Predicated region
        $region41: #{tpu_custom_call.1} parent=31 // pred_check
          %p213 = pneg %p91
        $region42: #{tpu_custom_call.1} parent=31 // pred_check_branch
          %215 = sbr.rel (%p213) target = $region44
        $region43: #{tpu_custom_call.1} parent=31 // pred_region
          %216 = dma.done [#allocation6], 2048
        $region44: #{tpu_custom_call.1} parent=31 // pred_fallthru
          _
        %s217 = sand.u32 %s31, 1
        %s218 = scalar_lea.sflag [#allocation3], %s217
        %s219 = sand.u32 %s31, 1
        %s220 = smul.addr %s219, 128
        %s221 = scalar_lea.vmem [#allocation2], %s220
        %p222 = pneg %p44
        %p223 = pneg %p41
        %s224 = sand.u32 %s23, 1
        %s225 = scalar_lea.sflag [#allocation6], %s224
        %s226 = sand.u32 %s57, 1
        %s227 = smul.addr %s226, 8
        %s228 = scalar_lea.vmem [#allocation5], %s227
        %p229 = pneg %p70
        %p230 = pneg %p67
        %p231 = pneg %p91
        %p232 = pneg %p88
        %p233 = pneg %p117
        %p234 = pneg %p114
        %s235 = sand.u32 %s104, 1
        %s236 = scalar_lea.sflag [#allocation4], %s235
        %s237 = sand.u32 %s104, 1
        %s238 = smul.addr %s237, 8
        %s239 = scalar_lea.vmem [#allocation8], %s238
        %v241 = vld [vmem:[%s199] sm:$0xff]
        %v242 = vld [vmem:[%s199 + $0x8] sm:$0xff]
        %v243 = vld [vmem:[%s199 + $0x10] sm:$0xff]
        %v244 = vld [vmem:[%s199 + $0x18] sm:$0xff]
        %v245 = vld [vmem:[%s199 + $0x20] sm:$0xff]
        %v246 = vld [vmem:[%s199 + $0x28] sm:$0xff]
        %v247 = vld [vmem:[%s199 + $0x30] sm:$0xff]
        %v248 = vld [vmem:[%s199 + $0x38] sm:$0xff]
        %v249 = vld [vmem:[%s199 + $0x40] sm:$0xff]
        %v250 = vld [vmem:[%s199 + $0x48] sm:$0xff]
        %v251 = vld [vmem:[%s199 + $0x50] sm:$0xff]
        %v252 = vld [vmem:[%s199 + $0x58] sm:$0xff]
        %v253 = vld [vmem:[%s199 + $0x60] sm:$0xff]
        %v254 = vld [vmem:[%s199 + $0x68] sm:$0xff]
        %v255 = vld [vmem:[%s199 + $0x70] sm:$0xff]
        %v256 = vld [vmem:[%s199 + $0x78] sm:$0xff]
        %v257 = vpack.c.bf16 %v242, %v241
        %v258 = vpack.c.bf16 %v244, %v243
        %v259 = vpack.c.bf16 %v246, %v245
        %v260 = vpack.c.bf16 %v248, %v247
        %v261 = vpack.c.bf16 %v250, %v249
        %v262 = vpack.c.bf16 %v252, %v251
        %v263 = vpack.c.bf16 %v254, %v253
        %v264 = vpack.c.bf16 %v256, %v255
        %v265 = vld [vmem:[%s208] sm:$0xff]
        %v266 = vpack.c.bf16 %v265, %v265
        %v267 = vld [vmem:[#allocation7] sm:$0xff]
        %v268 = vld [vmem:[#allocation7 + $0x8] sm:$0xff]
        %v269 = vld [vmem:[#allocation7 + $0x10] sm:$0xff]
        %v270 = vld [vmem:[#allocation7 + $0x18] sm:$0xff]
        %v271 = vld [vmem:[#allocation7 + $0x20] sm:$0xff]
        %v272 = vld [vmem:[#allocation7 + $0x28] sm:$0xff]
        %v273 = vld [vmem:[#allocation7 + $0x30] sm:$0xff]
        %v274 = vld [vmem:[#allocation7 + $0x38] sm:$0xff]
        %v275 = vld [vmem:[#allocation7 + $0x40] sm:$0xff]
        %v276 = vld [vmem:[#allocation7 + $0x48] sm:$0xff]
        %v277 = vld [vmem:[#allocation7 + $0x50] sm:$0xff]
        %v278 = vld [vmem:[#allocation7 + $0x58] sm:$0xff]
        %v279 = vld [vmem:[#allocation7 + $0x60] sm:$0xff]
        %v280 = vld [vmem:[#allocation7 + $0x68] sm:$0xff]
        %v281 = vld [vmem:[#allocation7 + $0x70] sm:$0xff]
        %v282 = vld [vmem:[#allocation7 + $0x78] sm:$0xff]
        %v283 = vpack.c.bf16 %v268, %v267
        %v284 = vpack.c.bf16 %v270, %v269
        %v285 = vpack.c.bf16 %v272, %v271
        %v286 = vpack.c.bf16 %v274, %v273
        %v287 = vpack.c.bf16 %v276, %v275
        %v288 = vpack.c.bf16 %v278, %v277
        %v289 = vpack.c.bf16 %v280, %v279
        %v290 = vpack.c.bf16 %v282, %v281
        %291 = vmatprep.subr.bf16.mxu0 0
        %292 = vmatpush1.bf16.msra.mxu0 %v257
        %293 = vmatprep.subr.bf16.mxu0 0
        %294 = vmatpush1.bf16.msra.mxu0 %v258
        %295 = vmatprep.subr.bf16.mxu0 0
        %296 = vmatpush1.bf16.msra.mxu0 %v259
        %297 = vmatprep.subr.bf16.mxu0 0
        %298 = vmatpush1.bf16.msra.mxu0 %v260
        %299 = vmatprep.subr.bf16.mxu0 0
        %300 = vmatpush1.bf16.msra.mxu0 %v261
        %301 = vmatprep.subr.bf16.mxu0 0
        %302 = vmatpush1.bf16.msra.mxu0 %v262
        %303 = vmatprep.subr.bf16.mxu0 0
        %304 = vmatpush1.bf16.msra.mxu0 %v263
        %305 = vmatprep.subr.bf16.mxu0 0
        %306 = vmatpush1.bf16.msra.mxu0 %v264
        %307 = vmatprep.subr.bf16.mxu0 0
        %308 = vmatpush1.bf16.msra.mxu0 0
        %309 = vmatprep.subr.bf16.mxu0 0
        %310 = vmatpush1.bf16.msra.mxu0 0
        %311 = vmatprep.subr.bf16.mxu0 0
        %312 = vmatpush1.bf16.msra.mxu0 0
        %313 = vmatprep.subr.bf16.mxu0 0
        %314 = vmatpush1.bf16.msra.mxu0 0
        %315 = vmatprep.subr.bf16.mxu0 0
        %316 = vmatpush1.bf16.msra.mxu0 0
        %317 = vmatprep.subr.bf16.mxu0 0
        %318 = vmatpush1.bf16.msra.mxu0 0
        %319 = vmatprep.subr.bf16.mxu0 0
        %320 = vmatpush1.bf16.msra.mxu0 0
        %321 = vmatprep.subr.bf16.mxu0 0
        %322 = vmatpush1.bf16.msra.mxu0 0
        %323 = vmatprep.mubr.bf16.mxu0 0
        %324 = vmatmul.mubr.bf16.gmra.mrb[0].mxu0 %v266
        %v325 = vpop.f32.mrb[0].mxu0
        %v326 = vadd.f32 0.0, %v325
        %v327 = vpop.f32.mrb[0].mxu0
        %v328 = vpop.f32.mrb[0].mxu0
        %v329 = vpop.f32.mrb[0].mxu0
        %330 = vdwg.mxu0
        %v331 = vpack.c.bf16 %v326, %v326
        %332 = vmatprep.subr.bf16.mxu0 0
        %333 = vmatpush1.bf16.msra.mxu0 %v283
        %334 = vmatprep.subr.bf16.mxu0 0
        %335 = vmatpush1.bf16.msra.mxu0 %v284
        %336 = vmatprep.subr.bf16.mxu0 0
        %337 = vmatpush1.bf16.msra.mxu0 %v285
        %338 = vmatprep.subr.bf16.mxu0 0
        %339 = vmatpush1.bf16.msra.mxu0 %v286
        %340 = vmatprep.subr.bf16.mxu0 0
        %341 = vmatpush1.bf16.msra.mxu0 %v287
        %342 = vmatprep.subr.bf16.mxu0 0
        %343 = vmatpush1.bf16.msra.mxu0 %v288
        %344 = vmatprep.subr.bf16.mxu0 0
        %345 = vmatpush1.bf16.msra.mxu0 %v289
        %346 = vmatprep.subr.bf16.mxu0 0
        %347 = vmatpush1.bf16.msra.mxu0 %v290
        %348 = vmatprep.subr.bf16.mxu0 0
        %349 = vmatpush1.bf16.msra.mxu0 0
        %350 = vmatprep.subr.bf16.mxu0 0
        %351 = vmatpush1.bf16.msra.mxu0 0
        %352 = vmatprep.subr.bf16.mxu0 0
        %353 = vmatpush1.bf16.msra.mxu0 0
        %354 = vmatprep.subr.bf16.mxu0 0
        %355 = vmatpush1.bf16.msra.mxu0 0
        %356 = vmatprep.subr.bf16.mxu0 0
        %357 = vmatpush1.bf16.msra.mxu0 0
        %358 = vmatprep.subr.bf16.mxu0 0
        %359 = vmatpush1.bf16.msra.mxu0 0
        %360 = vmatprep.subr.bf16.mxu0 0
        %361 = vmatpush1.bf16.msra.mxu0 0
        %362 = vmatprep.subr.bf16.mxu0 0
        %363 = vmatpush1.bf16.msra.mxu0 0
        %364 = vmatprep.mubr.bf16.mxu0 0
        %365 = vmatmul.mubr.bf16.gmra.mrb[0].mxu0 %v331
        %v366 = vpop.f32.mrb[0].mxu0
        %v367 = vadd.f32 0.0, %v366
        %v368 = vpop.f32.mrb[0].mxu0
        %v369 = vpop.f32.mrb[0].mxu0
        %v370 = vpop.f32.mrb[0].mxu0
        %371 = vdwg.mxu0
        %v372 = vlaneseq
        %v373 = vand.u32 %v372, 127
        %vm374 = vcmp.lt.s32.totalorder %v373, 32
        %v375 = vsel %vm374, %v367, -inf
        %376 = vmax.xlane.f32.xlu0 %v375
        %v377 = vpop.xlane.xlu0 %376
        %v378 = vsub.f32 %v375, %v377
        %v379 = vmul.f32 %v378, 1.442695
        %v380 = vpow.pop %v379
        %381 = vadd.xlane.f32.xlu0 %v380
        %v382 = vpop.xlane.xlu0 %381
        %v383 = vrcp.pop %v382
        %v384 = vmul.f32 %v380, %v383
        %385 = vst [vmem:[%s239] sm:$0xff] %v384
        %s386 = sand.u32 %s104, 1
        %s387 = scalar_lea.sflag [#allocation4], %s386
        %s388 = sand.u32 %s104, 1
        %s389 = smul.addr %s388, 8
        %s390 = scalar_lea.vmem [#allocation8], %s389
        // Predicated region
        $region45: #{tpu_custom_call.1} parent=31 // pred_check
          %p391 = pneg %p114
        $region46: #{tpu_custom_call.1} parent=31 // pred_check_branch
          %393 = sbr.rel (%p391) target = $region48
        $region47: #{tpu_custom_call.1} parent=31 // pred_region
          %s395 = ssub.s32 128, 128
          %396 = vsyncadd %s387, %s395
          %s397 = smul.addr %s23, 128
          %s398 = scalar_lea.hbm %s3, %s397
          %s400 = sshll.u32 %s390, 4
          %s401 = int_to_ptr.vmem [resolvable:$true] %s400
          %403 = dma.vmem_to_hbm [thread:$0]  %s401, 128, %s398, %s387
        $region48: #{tpu_custom_call.1} parent=31 // pred_fallthru
          _
      $region32: #{tpu_custom_call.1} parent=5 // pred_fallthru
        _
      %p404 = scmp.le.s32.totalorder 2, %s18
      // Predicated region
      $region49: #{tpu_custom_call.1} parent=5 // pred_check
        %p405 = pneg %p404
      $region50: #{tpu_custom_call.1} parent=5 // pred_check_branch
        %407 = sbr.rel (%p405) target = $region52
      $region51: #{tpu_custom_call.1} parent=5 // pred_region
        %s408 = ssub.s32 %s18, 2
        // Predicated region
        $region53: #{tpu_custom_call.1} parent=51 // pred_check
          %p409 = pneg %p120
        $region54: #{tpu_custom_call.1} parent=51 // pred_check_branch
          %411 = sbr.rel (%p409) target = $region56
        $region55: #{tpu_custom_call.1} parent=51 // pred_region
          %s412 = sand.u32 %s105, 1
          %s413 = scalar_lea.sflag [#allocation4], %s412
          %s414 = sand.u32 %s105, 1
          %s415 = smul.addr %s414, 8
          %s416 = scalar_lea.vmem [#allocation8], %s415
          %417 = dma.done %s413, 128
        $region56: #{tpu_custom_call.1} parent=51 // pred_fallthru
          _
      $region52: #{tpu_custom_call.1} parent=5 // pred_fallthru
        _
    $region6: #{tpu_custom_call.1} parent=1 // loop_footer
      %s22 = sadd.s32 1, %s18
    $region7: #{tpu_custom_call.1} parent=1 // loop_footer_branch
      %17 = sbr.rel target = $region3
    $region8: #{tpu_custom_call.1} parent=1 // loop_exit
      _
    %418 = vsyncpa [#allocation3], 1
    %s419 = scalar_lea.sflag [#allocation3], 1
    %420 = vsyncpa %s419, 1
    %421 = vsyncpa [#allocation6], 1
    %s422 = scalar_lea.sflag [#allocation6], 1
    %423 = vsyncpa %s422, 1
    %424 = vsyncpa [#allocation4], 1
    %s425 = scalar_lea.sflag [#allocation4], 1
    %426 = vsyncpa %s425, 1

</llo_original>
